<compile_context>
chip_gen: v6e
topology: v6e:2x2x1
jax: 0.10.0
libtpu: 0.0.40
codegen_flags: <defaults>
</compile_context>

<pallas_src>
import functools

import jax
import jax.numpy as jnp
from jax.experimental import pallas as pl
from jax.experimental.pallas import tpu as pltpu


# ---------------------------------------------------------------------------
# VMEM budgeting / tiling helpers.
# ---------------------------------------------------------------------------
def _vmem_budget_bytes():
    try:
        cap = int(pltpu.get_tpu_info().vmem_capacity_bytes)
    except Exception:
        cap = 64 * 1024 * 1024          # conservative (v7x-sized) fallback
    # Leave ~1/3 of physical VMEM for compiler-managed scratch / spills:
    # ~85 MiB on v5e/v6e (128 MiB physical), ~42 MiB on v7x (64 MiB physical).
    return int(min(cap * 2 // 3, 96 * 1024 * 1024))


def _largest_divisor_leq(n, cap):
    t = max(1, min(n, cap))
    while n % t:
        t -= 1
    return t


def _pick_batch_tile(B, N, Cs, Ct, bytes_s, bytes_t, budget):
    # Per-unit-of-batch VMEM footprint:
    #   double-buffered native-dtype input blocks (q,k,v student + teacher)
    #   + the scaled bf16 copies built in-kernel
    #   + ~6 live f32 (3N, N) slabs for the slab cross-entropy.
    per_b = (2 * 3 * N * (Cs * bytes_s + Ct * bytes_t)
             + 3 * N * (Cs + Ct) * 2
             + 6 * 3 * N * N * 4)
    headroom = 2 * 1024 * 1024
    return int(max(1, min(B, (budget - headroom) // max(1, per_b))))


# ---------------------------------------------------------------------------
# Kernel 1: relation (qkv) loss, fused over all layers.
# grid = (L * num_batch_tiles,); per step the kernel sees six (1, tb, N, C)
# blocks (student q/k/v of width Cs, teacher q/k/v of width Ct).
# ---------------------------------------------------------------------------
def _relation_kernel(sq_ref, sk_ref, sv_ref, tq_ref, tk_ref, tv_ref, out_ref, *,
                     n_tok, n_heads, ds, dt, s_scale_sqrt, t_scale_sqrt,
                     nb, tb, true_batch, needs_mask, exp_dtype):
    N = n_tok
    # Concatenate q/k/v along the token axis in VMEM (cheap; replaces the
    # host-side HBM concat round trip).  Fold the 1/sqrt(C/Ar) scale into the
    # operands as scale**0.5: both gram operands come from the same tensor, so
    # the gram comes out scaled by exactly 1/sqrt(C/Ar) as in the reference.
    s_all = jnp.concatenate([sq_ref[0], sk_ref[0], sv_ref[0]], axis=1)  # (tb,3N,Cs)
    t_all = jnp.concatenate([tq_ref[0], tk_ref[0], tv_ref[0]], axis=1)  # (tb,3N,Ct)
    # bf16 matmul operands keep the MXU on its native path on v5e/v6e/v7x;
    # accumulation and the softmax math stay in f32.
    s_bf = (s_all * s_scale_sqrt).astype(jnp.bfloat16)
    t_bf = (t_all * t_scale_sqrt).astype(jnp.bfloat16)

    per_batch = jnp.zeros((tb, 1), jnp.float32)
    # TODO(synk): for large Ar (>=8) and ds >= 128, move the head axis into the
    # grid (pre-shape to (L, Ar, B, 3N, ds)) instead of this static unroll.
    for h in range(n_heads):
        sh = s_bf[:, :, h * ds:(h + 1) * ds]              # (tb, 3N, ds)
        th = t_bf[:, :, h * dt:(h + 1) * dt]              # (tb, 3N, dt)
        # TODO(synk): when N < 128 a single full (3N x 3N) gram per head would
        # use the MXU lanes better; the slab form below is chosen for
        # production N >= 128 (3x smaller live f32 intermediates, no
        # post-matmul lane slices at non-128-multiple offsets).
        for j in range(3):
            s_col = sh[:, j * N:(j + 1) * N, :]           # (tb, N, ds)
            t_col = th[:, j * N:(j + 1) * N, :]           # (tb, N, dt)
            # Per-(head, j) N-column slab; rows cover all three i blocks.
            As_j = jnp.einsum("bpd,bqd->bpq", sh, s_col,
                              preferred_element_type=jnp.float32)  # (tb,3N,N)
            At_j = jnp.einsum("bpd,bqd->bpq", th, t_col,
                              preferred_element_type=jnp.float32)  # (tb,3N,N)
            # Soft cross-entropy without materializing log_p or a normalized
            # teacher softmax:
            #   CE_row = LSE(z_s) - <te, z_s> / sum(te),  z_s = As - max(As),
            #   te = exp(At - max(At)).
            z_s = As_j - jnp.max(As_j, axis=-1, keepdims=True)
            lse_s = jnp.log(jnp.sum(jnp.exp(z_s), axis=-1, keepdims=True))
            te = jnp.exp((At_j - jnp.max(At_j, axis=-1, keepdims=True))
                         .astype(exp_dtype)).astype(jnp.float32)
            sum_te = jnp.sum(te, axis=-1, keepdims=True)            # (tb,3N,1)
            dot_tz = jnp.sum(te * z_s, axis=-1, keepdims=True)      # (tb,3N,1)
            per_row = lse_s - dot_tz / sum_te                       # (tb,3N,1)
            per_batch = per_batch + jnp.sum(per_row, axis=1)        # (tb,1)

    if needs_mask:
        b = pl.program_id(0) % nb
        valid = jnp.minimum(true_batch - b * tb, tb)
        row_ok = jax.lax.broadcasted_iota(jnp.int32, (tb, 1), 0) < valid
        per_batch = jnp.where(row_ok, per_batch, 0.0)

    # Raw partial sum; normalization is a compile-time constant applied outside.
    out_ref[...] = jnp.sum(per_batch).reshape(1, 1, 1, 1)


def relation_loss(student_attn_tuple, teacher_attn_tuple, Ar, *,
                  batch_tile=None, exp_dtype=jnp.float32):
    """student/teacher_attn_tuple: per-layer tuples of three (B, N, C) arrays.

    exp_dtype: jnp.float32 everywhere by default; jnp.bfloat16 is a per-
    generation tuning knob for the teacher exp on v6e/v7x (do NOT use on v5e).
    """
    L = len(student_attn_tuple)
    B, N, Cs = student_attn_tuple[0][0].shape
    Ct = teacher_attn_tuple[0][0].shape[-1]
    ds, dt = Cs // Ar, Ct // Ar

    # Stack each of q/k/v over layers -> (L, B, N, C); channels stay LAST
    # (lane-dense) and in their native dtype.  No token-axis concat on the host.
    # TODO(synk): if the surrounding model already produces layer-stacked
    # activations (e.g. from a scanned transformer), pass them straight through
    # and this stack disappears entirely.
    sq = jnp.stack([layer[0] for layer in student_attn_tuple])
    sk = jnp.stack([layer[1] for layer in student_attn_tuple])
    sv = jnp.stack([layer[2] for layer in student_attn_tuple])
    tq = jnp.stack([layer[0] for layer in teacher_attn_tuple])
    tk = jnp.stack([layer[1] for layer in teacher_attn_tuple])
    tv = jnp.stack([layer[2] for layer in teacher_attn_tuple])

    bytes_s = jnp.dtype(sq.dtype).itemsize
    bytes_t = jnp.dtype(tq.dtype).itemsize
    budget = _vmem_budget_bytes()
    if batch_tile is None:
        tb = _pick_batch_tile(B, N, Cs, Ct, bytes_s, bytes_t, budget)
    else:
        tb = max(1, min(B, int(batch_tile)))

    # Prefer an exact divisor of B when one close to the VMEM-optimal tile
    # exists; otherwise keep the large tile and mask a zero-padded tail tile
    # (never collapse to tb=1 for awkward batch sizes).
    div = _largest_divisor_leq(B, tb)
    if div * 2 > tb:
        tb = div
    nb = -(-B // tb)                      # cdiv
    b_pad = nb * tb
    needs_mask = b_pad != B
    if needs_mask:
        pad = [(0, 0), (0, b_pad - B), (0, 0), (0, 0)]
        sq, sk, sv = [jnp.pad(a, pad) for a in (sq, sk, sv)]
        tq, tk, tv = [jnp.pad(a, pad) for a in (tq, tk, tv)]

    kernel = functools.partial(
        _relation_kernel, n_tok=N, n_heads=Ar, ds=ds, dt=dt,
        s_scale_sqrt=float(ds) ** -0.25,   # (1/sqrt(Cs/Ar))**0.5
        t_scale_sqrt=float(dt) ** -0.25,   # (1/sqrt(Ct/Ar))**0.5
        nb=nb, tb=tb, true_batch=B, needs_mask=needs_mask, exp_dtype=exp_dtype)

    def spec(c):
        return pl.BlockSpec((1, tb, N, c), lambda i: (i // nb, i % nb, 0, 0))

    partials = pl.pallas_call(
        kernel,
        out_shape=jax.ShapeDtypeStruct((L, nb, 1, 1), jnp.float32),
        grid_spec=pltpu.PrefetchScalarGridSpec(
            num_scalar_prefetch=0,
            # Single flattened parallel axis (L * nb) so megacore / v7x dual-TC
            # load-balances even for small or odd L.
            grid=(L * nb,),
            in_specs=[spec(Cs), spec(Cs), spec(Cs),
                      spec(Ct), spec(Ct), spec(Ct)],
            out_specs=pl.BlockSpec((1, 1, 1, 1),
                                   lambda i: (i // nb, i % nb, 0, 0)),
        ),
        compiler_params=pltpu.CompilerParams(
            dimension_semantics=("parallel",),
            vmem_limit_bytes=budget),
    )(sq, sk, sv, tq, tk, tv)

    # Each partial sums CE rows over (i rows, j chunks, heads, batch tile);
    # dividing by B*Ar*N recovers the per-(i,j,layer) means, then /(9*L).
    return jnp.sum(partials) * (1.0 / (9.0 * L * B * Ar * N))


# ---------------------------------------------------------------------------
# Kernel 2: pred_loss (CE, reduction='sum') + soft_loss (soft cross entropy).
# One-hot is built in-kernel from an iota==label compare; exact softmax math.
# ---------------------------------------------------------------------------
def _pred_soft_kernel(pred_ref, tout_ref, label_ref, pred_loss_ref, soft_loss_ref):
    logits = pred_ref[...].astype(jnp.float32)               # (B, C)
    bsz, ncls = logits.shape
    z = logits - jnp.max(logits, axis=-1, keepdims=True)
    lse = jnp.log(jnp.sum(jnp.exp(z), axis=-1, keepdims=True))   # (B, 1)

    # pred_loss = sum_b -log_softmax(pred)[b, label_b]
    col = jax.lax.broadcasted_iota(jnp.int32, (bsz, ncls), 1)
    onehot = (col == label_ref[...]).astype(jnp.float32)     # label_ref: (B, 1)
    pred_loss_ref[...] = jnp.sum(onehot * (lse - z), keepdims=True)

    # soft_loss = mean_b sum_c -softmax(teacher)[b,c] * log_softmax(pred)[b,c]
    t = tout_ref[...].astype(jnp.float32)                    # (B, C)
    te = jnp.exp(t - jnp.max(t, axis=-1, keepdims=True))
    sum_te = jnp.sum(te, axis=-1, keepdims=True)
    dot_tz = jnp.sum(te * z, axis=-1, keepdims=True)
    per_row = lse - dot_tz / sum_te                          # (B, 1)
    soft_loss_ref[...] = jnp.sum(per_row, keepdims=True) * (1.0 / bsz)


def pred_and_soft_loss(pred_y, teacher_logits, label):
    B = pred_y.shape[0]
    label2d = label.astype(jnp.int32).reshape(B, 1)
    pred_loss, soft_loss = pl.pallas_call(
        _pred_soft_kernel,
        out_shape=(jax.ShapeDtypeStruct((1, 1), jnp.float32),
                   jax.ShapeDtypeStruct((1, 1), jnp.float32)),
    )(pred_y, teacher_logits, label2d)
    return pred_loss[0, 0], soft_loss[0, 0]


# ---------------------------------------------------------------------------
# Synthetic deterministic teacher (plain JAX glue).
# ---------------------------------------------------------------------------
def teacher_forward(x, params):
    # x: (B, N, D_in)
    feats = jnp.mean(x, axis=1)                               # (B, D_in)
    logits = feats @ params["w_cls"] + params["b_cls"]        # (B, num_classes)
    attn = []
    for wq, wk, wv in zip(params["wq"], params["wk"], params["wv"]):
        attn.append((x @ wq, x @ wk, x @ wv))                 # each (B, N, Ct)
    return logits, tuple(attn)


# ---------------------------------------------------------------------------
# Distlossqkv forward (Pallas-backed).
# ---------------------------------------------------------------------------
def distlossqkv_forward(x, pred_y, student_attn_tuple, label, teacher_params,
                        qkv_weight, pred_weight, soft_weight, Ar, num_classes,
                        *, batch_tile=None):
    teacher_logits, teacher_attn_tuple = teacher_forward(x, teacher_params)

    pred_loss, soft_loss = pred_and_soft_loss(pred_y, teacher_logits, label)
    qkv_loss = relation_loss(student_attn_tuple, teacher_attn_tuple, Ar,
                             batch_tile=batch_tile)

    total_loss = (pred_loss * pred_weight + qkv_loss * qkv_weight
                  + soft_loss * soft_weight)
    return total_loss, {"qkv_loss": qkv_loss, "pred_loss": pred_loss,
                        "soft_loss": soft_loss, "total_loss": total_loss}


# ---------------------------------------------------------------------------
# Pure-JAX reference for correctness checking.
# ---------------------------------------------------------------------------
def _ref_soft_ce(pred, targ):
    logp = jax.nn.log_softmax(pred, axis=-1)
    p = jax.nn.softmax(targ, axis=-1)
    return jnp.mean(jnp.sum(-p * logp, axis=-1))


def _ref_relation(student_list, teacher_list, Ar):
    total = jnp.float32(0.0)
    for s_layer, t_layer in zip(student_list, teacher_list):
        s = list(s_layer)
        t = list(t_layer)
        B, N, Cs = s[0].shape
        Ct = t[0].shape[-1]
        for i in range(3):
            for j in range(3):
                mi = s[i].reshape(B, N, Ar, Cs // Ar).transpose(0, 2, 1, 3) / (Cs / Ar) ** 0.5
                mj = s[j].reshape(B, N, Ar, Cs // Ar).transpose(0, 2, 3, 1)
                As = mi @ mj
                mi = t[i].reshape(B, N, Ar, Ct // Ar).transpose(0, 2, 1, 3) / (Ct / Ar) ** 0.5
                mj = t[j].reshape(B, N, Ar, Ct // Ar).transpose(0, 2, 3, 1)
                At = mi @ mj
                total = total + _ref_soft_ce(As, At)
    return total / (9.0 * len(student_list))


def _ref_forward(x, pred_y, student_attn, label, teacher_params,
                 qkv_w, pred_w, soft_w, Ar, num_classes):
    t_logits, t_attn = teacher_forward(x, teacher_params)
    logp = jax.nn.log_softmax(pred_y, axis=-1)
    pred_loss = jnp.sum(-jax.nn.one_hot(label, num_classes) * logp)
    qkv_loss = _ref_relation(student_attn, t_attn, Ar)
    soft_loss = _ref_soft_ce(pred_y, t_logits)
    total = pred_loss * pred_w + qkv_loss * qkv_w + soft_loss * soft_w
    return total, pred_loss, qkv_loss, soft_loss


# ---------------------------------------------------------------------------
def _make_case(key, B, N, D_in, Cs, Ct, num_classes, layer_num):
    keys = jax.random.split(key, 6 + 4 * layer_num)
    x = jax.random.normal(keys[0], (B, N, D_in), jnp.float32)
    pred_y = jax.random.normal(keys[1], (B, num_classes), jnp.float32)
    label = jax.random.randint(keys[2], (B,), 0, num_classes, dtype=jnp.int32)

    student = []
    for l in range(layer_num):
        kq, kk, kv = jax.random.split(keys[3 + l], 3)
        student.append((
            jax.random.normal(kq, (B, N, Cs), jnp.float32),
            jax.random.normal(kk, (B, N, Cs), jnp.float32),
            jax.random.normal(kv, (B, N, Cs), jnp.float32),
        ))
    student = tuple(student)

    base = 3 + layer_num
    teacher_params = {
        "w_cls": 0.05 * jax.random.normal(keys[base], (D_in, num_classes), jnp.float32),
        "b_cls": 0.01 * jax.random.normal(keys[base + 1], (num_classes,), jnp.float32),
        "wq": [0.05 * jax.random.normal(keys[base + 2 + l], (D_in, Ct), jnp.float32)
               for l in range(layer_num)],
        "wk": [0.05 * jax.random.normal(keys[base + 2 + layer_num + l], (D_in, Ct), jnp.float32)
               for l in range(layer_num)],
        "wv": [0.05 * jax.random.normal(keys[base + 2 + 2 * layer_num + l], (D_in, Ct), jnp.float32)
               for l in range(layer_num)],
    }
    return x, pred_y, label, student, teacher_params


def _run_check(key, B, N, D_in, Cs, Ct, Ar, num_classes, layer_num,
               qkv_w, pred_w, soft_w, batch_tile=None):
    x, pred_y, label, student, teacher_params = _make_case(
        key, B, N, D_in, Cs, Ct, num_classes, layer_num)

    total_loss, terms = distlossqkv_forward(
        x, pred_y, student, label, teacher_params,
        qkv_w, pred_w, soft_w, Ar, num_classes, batch_tile=batch_tile)
    total_loss = jax.block_until_ready(total_loss)

    ref_total, ref_pred, ref_qkv, ref_soft = _ref_forward(
        x, pred_y, student, label, teacher_params,
        qkv_w, pred_w, soft_w, Ar, num_classes)

    # pred/soft losses are exact f32 math; qkv uses bf16 MXU operands, so its
    # tolerance is looser (input-rounding level, not the approx-recip level).
    assert jnp.allclose(terms["pred_loss"], ref_pred, rtol=1e-3, atol=1e-3), \
        (terms["pred_loss"], ref_pred)
    assert jnp.allclose(terms["soft_loss"], ref_soft, rtol=1e-3, atol=1e-3), \
        (terms["soft_loss"], ref_soft)
    assert jnp.allclose(terms["qkv_loss"], ref_qkv, rtol=2e-2, atol=2e-2), \
        (terms["qkv_loss"], ref_qkv)
    assert jnp.allclose(total_loss, ref_total, rtol=2e-2, atol=2e-2), \
        (total_loss, ref_total)


if __name__ == "__main__":
    N, D_in = 16, 48
    Cs, Ct, Ar = 64, 128, 4
    num_classes = 32
    layer_num = 2
    qkv_weight, pred_weight, soft_weight = 1.0, 0.5, 0.7

    key = jax.random.PRNGKey(0)
    k1, k2 = jax.random.split(key)

    # Main case: B=2, auto-chosen batch tile (divides B; no masking).
    _run_check(k1, 2, N, D_in, Cs, Ct, Ar, num_classes, layer_num,
               qkv_weight, pred_weight, soft_weight)

    # Awkward-batch case: B=3 with an explicit batch tile of 2 exercises the
    # zero-padded + in-kernel masked tail tile path (tb never collapses to 1).
    _run_check(k2, 3, N, D_in, Cs, Ct, Ar, num_classes, layer_num,
               qkv_weight, pred_weight, soft_weight, batch_tile=2)

    print("KERNEL_OK")
</pallas_src>

<mosaic_0001>
module attributes {stable_mosaic.version = 11 : i64} {
  func.func @_pred_soft_kernel(%arg0: memref<2x32xf32, #tpu.memory_space<vmem>>, %arg1: memref<2x32xf32, #tpu.memory_space<vmem>>, %arg2: memref<2x1xi32, #tpu.memory_space<vmem>>, %arg3: memref<1x1xf32, #tpu.memory_space<vmem>>, %arg4: memref<1x1xf32, #tpu.memory_space<vmem>>) attributes {dimension_semantics = [], scalar_prefetch = 0 : i64, scratch_operands = 0 : i64, tpu.core_type = #tpu.core_type<tc>} {
    %c0 = arith.constant 0 : index
    %c0_0 = arith.constant 0 : index
    %0 = vector.load %arg0[%c0, %c0_0] : memref<2x32xf32, #tpu.memory_space<vmem>>, vector<2x32xf32>
    %cst = arith.constant dense<0xFF800000> : vector<2xf32>
    %1 = vector.multi_reduction <maximumf>, %0, %cst [1] : vector<2x32xf32> to vector<2xf32>
    %2 = vector.shape_cast %1 : vector<2xf32> to vector<2x1xf32>
    %3 = vector.broadcast %2 : vector<2x1xf32> to vector<2x32xf32>
    %4 = arith.subf %0, %3 : vector<2x32xf32>
    %5 = math.exp %4 : vector<2x32xf32>
    %cst_1 = arith.constant dense<0.000000e+00> : vector<2xf32>
    %6 = vector.multi_reduction <add>, %5, %cst_1 [1] : vector<2x32xf32> to vector<2xf32>
    %7 = vector.shape_cast %6 : vector<2xf32> to vector<2x1xf32>
    %8 = math.log %7 : vector<2x1xf32>
    %9 = tpu.iota {dimensions = array<i32: 1>} : vector<2x32xi32>
    %c0_2 = arith.constant 0 : index
    %c0_3 = arith.constant 0 : index
    %10 = vector.load %arg2[%c0_2, %c0_3] : memref<2x1xi32, #tpu.memory_space<vmem>>, vector<2x1xi32>
    %11 = vector.broadcast %10 : vector<2x1xi32> to vector<2x32xi32>
    %12 = arith.cmpi eq, %9, %11 : vector<2x32xi32>
    %13 = arith.extui %12 : vector<2x32xi1> to vector<2x32xi32>
    %14 = arith.sitofp %13 : vector<2x32xi32> to vector<2x32xf32>
    %15 = vector.broadcast %8 : vector<2x1xf32> to vector<2x32xf32>
    %16 = arith.subf %15, %4 : vector<2x32xf32>
    %17 = arith.mulf %14, %16 : vector<2x32xf32>
    %18 = vector.shape_cast %17 : vector<2x32xf32> to vector<1x2x32xf32>
    %cst_4 = arith.constant dense<0.000000e+00> : vector<1xf32>
    %19 = vector.multi_reduction <add>, %18, %cst_4 [1, 2] : vector<1x2x32xf32> to vector<1xf32>
    %20 = vector.shape_cast %19 : vector<1xf32> to vector<1x1x1xf32>
    %21 = vector.extract %20[0, 0, 0] : f32 from vector<1x1x1xf32>
    %22 = vector.broadcast %21 : f32 to vector<1x1xf32>
    %c0_5 = arith.constant 0 : index
    %c0_6 = arith.constant 0 : index
    %23 = vector.load %arg3[%c0_5, %c0_6] : memref<1x1xf32, #tpu.memory_space<vmem>>, vector<1x1xf32>
    tpu.vector_store %arg3[%c0_5, %c0_6], %22 {strides = array<i32>} : memref<1x1xf32, #tpu.memory_space<vmem>>, vector<1x1xf32>,
    %c0_7 = arith.constant 0 : index
    %c0_8 = arith.constant 0 : index
    %24 = vector.load %arg1[%c0_7, %c0_8] : memref<2x32xf32, #tpu.memory_space<vmem>>, vector<2x32xf32>
    %cst_9 = arith.constant dense<0xFF800000> : vector<2xf32>
    %25 = vector.multi_reduction <maximumf>, %24, %cst_9 [1] : vector<2x32xf32> to vector<2xf32>
    %26 = vector.shape_cast %25 : vector<2xf32> to vector<2x1xf32>
    %27 = vector.broadcast %26 : vector<2x1xf32> to vector<2x32xf32>
    %28 = arith.subf %24, %27 : vector<2x32xf32>
    %29 = math.exp %28 : vector<2x32xf32>
    %cst_10 = arith.constant dense<0.000000e+00> : vector<2xf32>
    %30 = vector.multi_reduction <add>, %29, %cst_10 [1] : vector<2x32xf32> to vector<2xf32>
    %31 = vector.shape_cast %30 : vector<2xf32> to vector<2x1xf32>
    %32 = arith.mulf %29, %4 : vector<2x32xf32>
    %cst_11 = arith.constant dense<0.000000e+00> : vector<2xf32>
    %33 = vector.multi_reduction <add>, %32, %cst_11 [1] : vector<2x32xf32> to vector<2xf32>
    %34 = vector.shape_cast %33 : vector<2xf32> to vector<2x1xf32>
    %35 = arith.divf %34, %31 : vector<2x1xf32>
    %36 = arith.subf %8, %35 : vector<2x1xf32>
    %37 = vector.shape_cast %36 : vector<2x1xf32> to vector<1x2x1xf32>
    %cst_12 = arith.constant dense<0.000000e+00> : vector<1xf32>
    %38 = vector.multi_reduction <add>, %37, %cst_12 [1, 2] : vector<1x2x1xf32> to vector<1xf32>
    %39 = vector.shape_cast %38 : vector<1xf32> to vector<1x1x1xf32>
    %40 = vector.extract %39[0, 0, 0] : f32 from vector<1x1x1xf32>
    %41 = vector.broadcast %40 : f32 to vector<1x1xf32>
    %cst_13 = arith.constant 5.000000e-01 : f32
    %42 = vector.broadcast %cst_13 : f32 to vector<1x1xf32>
    %43 = arith.mulf %41, %42 : vector<1x1xf32>
    %c0_14 = arith.constant 0 : index
    %c0_15 = arith.constant 0 : index
    %44 = vector.load %arg4[%c0_14, %c0_15] : memref<1x1xf32, #tpu.memory_space<vmem>>, vector<1x1xf32>
    tpu.vector_store %arg4[%c0_14, %c0_15], %43 {strides = array<i32>} : memref<1x1xf32, #tpu.memory_space<vmem>>, vector<1x1xf32>,
    return
  }
}

</mosaic_0001>

<llo_original>
// kernel: tpu_custom_call.1
$region0: #{tpu_custom_call.1}
  #allocation0 [shape = 'u32[]', space=smem, size = 0x4, offset = 0x4, fixed_abs, tag = 'smem constant byte address 0x4 - core index']
  #allocation1 [shape = 'u32[144,128]{1,0:T(1,128)}', space=vmem, size = 0x12000, scoped, tag = 'internal scratch']
  %s0 = inlined_call_operand.vmem [shape: f32[2,32], index: 0, kind: input, shape index: {}]
  %s1 = inlined_call_operand.vmem [shape: f32[2,32], index: 1, kind: input, shape index: {}]
  %s2 = inlined_call_operand.vmem [shape: s32[2,1], index: 2, kind: input, shape index: {}]
  %s3 = inlined_call_operand.hbm [shape: f32[1,1], index: 3, kind: output, shape index: {0}]
  %s4 = inlined_call_operand.hbm [shape: f32[1,1], index: 4, kind: output, shape index: {1}]
  %5 = xla_tuple %s3, %s4
  %s6 = sld [smem:[#allocation0]]
  $region30: #{tpu_custom_call.1} parent=0
    _
  %s8 = ssub.s32 1, %s6
  %s9 = scalar_select 0, %s8, %s6
  $region1: #{tpu_custom_call.1} parent=0
    #allocation2 [shape = 'u8[512]{0}', space=vmem, size = 0x400, scoped, tag = 'output window, operand 0, single buffered']
    #allocation3 [shape = 's32[1]{0}', space=sflag, size = 0x4, scoped, tag = 'scoped memory for tpu_custom_call.1']
    #allocation4 [shape = 'u8[512]{0}', space=vmem, size = 0x400, scoped, tag = 'output window, operand 1, single buffered']
    #allocation5 [shape = 's32[1]{0}', space=sflag, size = 0x4, scoped, tag = 'scoped memory for tpu_custom_call.1']
    %10 = vsyncpa [#allocation3], 0
    %11 = vsyncpa [#allocation5], 0
    // Predicated region
    $region2: #{tpu_custom_call.1} parent=1 // pred_check
      _
    $region3: #{tpu_custom_call.1} parent=1 // pred_check_branch
      %13 = sbr.rel (0) target = $region5
    $region4: #{tpu_custom_call.1} parent=1 // pred_region
      _
    $region5: #{tpu_custom_call.1} parent=1 // pred_fallthru
      _
    // Predicated region
    $region6: #{tpu_custom_call.1} parent=1 // pred_check
      _
    $region7: #{tpu_custom_call.1} parent=1 // pred_check_branch
      %15 = sbr.rel (0) target = $region9
    $region8: #{tpu_custom_call.1} parent=1 // pred_region
      _
    $region9: #{tpu_custom_call.1} parent=1 // pred_fallthru
      _
    // Predicated region
    $region10: #{tpu_custom_call.1} parent=1 // pred_check
      _
    $region11: #{tpu_custom_call.1} parent=1 // pred_check_branch
      %17 = sbr.rel (0) target = $region13
    $region12: #{tpu_custom_call.1} parent=1 // pred_region
      _
    $region13: #{tpu_custom_call.1} parent=1 // pred_fallthru
      _
    %v18 = vld [vmem:[%s0] sm:$0x3]
    %vm19 = vcmask 254976
    %v20 = vsel %vm19, %v18, -inf
    %21 = vmax.xlane.f32.xlu0 %v20
    %v22 = vpop.xlane.xlu0 %21
    %v23 = vsub.f32 %v18, %v22
    %v24 = vmul.f32 %v23, 1.442695
    %v25 = vpow.pop %v24
    %v26 = vsel %vm19, %v25, 0.0
    %27 = vadd.xlane.f32.xlu0 %v26
    %v28 = vpop.xlane.xlu0 %27
    %v29 = vlog2.pop %v28
    %v30 = vmul.f32 %v29, 0.6931472
    %v31 = vlaneseq
    %v32 = vand.u32 %v31, 127
    %v33 = vld [vmem:[%s2] sm:$0x3]
    %34 = vset.pattern.permute.xlu0 0
    %35 = vperm.xlu0 %34, %v33
    %v36 = vpop.permute.xlu0 %35
    %vm37 = vcmp.eq.s32.totalorder %v32, %v36
    %v38 = vsel %vm37, 1, 0
    %v39 = vcvt.s32.f32 %v38
    %v40 = vsub.f32 %v30, %v23
    %v41 = vmul.f32 %v39, %v40
    %v42 = vsel %vm19, %v41, 0.0
    %43 = vadd.xlane.f32.xlu0 %v42
    %v44 = vpop.xlane.xlu0 %43
    %v45 = vrot.slane %v44, 4
    %v46 = vadd.f32 %v44, %v45
    %v47 = vrot.slane %v46, 2
    %v48 = vadd.f32 %v46, %v47
    %v49 = vrot.slane %v48, 1
    %v50 = vadd.f32 %v48, %v49
    %s51 = vtos %v50
    %v52 = vstv %s51
    %vm53 = vcmask 0
    %54 = vst.msk [vmem:[#allocation2] sm:$0x1] %vm53, %v52
    %v55 = vld [vmem:[%s1] sm:$0x3]
    %v56 = vsel %vm19, %v55, -inf
    %57 = vmax.xlane.f32.xlu0 %v56
    %v58 = vpop.xlane.xlu0 %57
    %v59 = vsub.f32 %v55, %v58
    %v60 = vmul.f32 %v59, 1.442695
    %v61 = vpow.pop %v60
    %v62 = vsel %vm19, %v61, 0.0
    %63 = vadd.xlane.f32.xlu0 %v62
    %v64 = vpop.xlane.xlu0 %63
    %v65 = vmul.f32 %v61, %v23
    %v66 = vsel %vm19, %v65, 0.0
    %67 = vadd.xlane.f32.xlu0 %v66
    %v68 = vpop.xlane.xlu0 %67
    %v69 = vrcp.pop %v64
    %v70 = vmul.f32 %v68, %v69
    %v71 = vsub.f32 %v30, %v70
    %vm72 = vcmask 1024
    %v73 = vsel %vm72, %v71, 0.0
    %74 = vadd.xlane.f32.xlu0 %v73
    %v75 = vpop.xlane.xlu0 %74
    %v76 = vrot.slane %v75, 4
    %v77 = vadd.f32 %v75, %v76
    %v78 = vrot.slane %v77, 2
    %v79 = vadd.f32 %v77, %v78
    %v80 = vrot.slane %v79, 1
    %v81 = vadd.f32 %v79, %v80
    %s82 = vtos %v81
    %v83 = vstv %s82
    %v84 = vmul.f32 %v83, 0.5
    %85 = vst.msk [vmem:[#allocation4] sm:$0x1] %vm53, %v84
    // Predicated region
    $region14: #{tpu_custom_call.1} parent=1 // pred_check
      _
    $region15: #{tpu_custom_call.1} parent=1 // pred_check_branch
      %87 = sbr.rel (0) target = $region17
    $region16: #{tpu_custom_call.1} parent=1 // pred_region
      %s89 = ssub.s32 16, 16
      %90 = vsyncadd [#allocation3], %s89
      %s92 = sshll.u32 [#allocation2], 4
      %s93 = int_to_ptr.vmem [resolvable:$true] %s92
      %95 = dma.vmem_to_hbm [thread:$0]  %s93, 16, %s3, [#allocation3]
    $region17: #{tpu_custom_call.1} parent=1 // pred_fallthru
      _
    // Predicated region
    $region18: #{tpu_custom_call.1} parent=1 // pred_check
      _
    $region19: #{tpu_custom_call.1} parent=1 // pred_check_branch
      %97 = sbr.rel (0) target = $region21
    $region20: #{tpu_custom_call.1} parent=1 // pred_region
      %s99 = ssub.s32 16, 16
      %100 = vsyncadd [#allocation5], %s99
      %s102 = sshll.u32 [#allocation4], 4
      %s103 = int_to_ptr.vmem [resolvable:$true] %s102
      %105 = dma.vmem_to_hbm [thread:$0]  %s103, 16, %s4, [#allocation5]
    $region21: #{tpu_custom_call.1} parent=1 // pred_fallthru
      _
    // Predicated region
    $region22: #{tpu_custom_call.1} parent=1 // pred_check
      _
    $region23: #{tpu_custom_call.1} parent=1 // pred_check_branch
      %107 = sbr.rel (0) target = $region25
    $region24: #{tpu_custom_call.1} parent=1 // pred_region
      %108 = dma.done [#allocation3], 16
    $region25: #{tpu_custom_call.1} parent=1 // pred_fallthru
      _
    // Predicated region
    $region26: #{tpu_custom_call.1} parent=1 // pred_check
      _
    $region27: #{tpu_custom_call.1} parent=1 // pred_check_branch
      %110 = sbr.rel (0) target = $region29
    $region28: #{tpu_custom_call.1} parent=1 // pred_region
      %111 = dma.done [#allocation5], 16
    $region29: #{tpu_custom_call.1} parent=1 // pred_fallthru
      _
    %112 = vsyncpa [#allocation3], 1
    %113 = vsyncpa [#allocation5], 1

</llo_original>
